<compile_context>
chip_gen: v6e
topology: v6e:2x2x1
jax: 0.10.0
libtpu: 0.0.40
codegen_flags: <defaults>
</compile_context>

<pallas_src>
import jax
import jax.numpy as jnp
from jax import lax
from jax.experimental import pallas as pl
from jax.experimental.pallas import tpu as pltpu


def _round_up(x, m):
    return ((x + m - 1) // m) * m


def _vmem_capacity_bytes():
    """Physical VMEM per core; conservative 64 MiB (v7x) if query unavailable."""
    try:
        info = pltpu.get_tpu_info()
        cap = getattr(info, "vmem_capacity_bytes", None)
        if cap:
            return int(cap)
    except Exception:
        pass
    return 64 * 1024 * 1024


# ---------------------------------------------------------------------------
# Kernel bodies
# ---------------------------------------------------------------------------
def _relu_linear_finalize(h, w_ref, b_ref, o_ref):
    """o = relu(h) @ W + b   (h is the f32 aggregation result)."""
    a = jnp.maximum(h, 0.0)
    s = jnp.dot(a.astype(w_ref.dtype), w_ref[...],
                preferred_element_type=jnp.float32) + b_ref[...]
    o_ref[...] = s.astype(o_ref.dtype)


def _layernorm_finalize(h, gamma_ref, beta_ref, o_ref):
    """o = LayerNorm(h)  (f32, eps=1e-5, affine)."""
    mean = jnp.mean(h, axis=-1, keepdims=True)
    c = h - mean
    var = jnp.mean(c * c, axis=-1, keepdims=True)
    o_ref[...] = (c * lax.rsqrt(var + 1e-5) * gamma_ref[...]
                  + beta_ref[...]).astype(o_ref.dtype)


# --- full-K kernels: grid=(num_m,), no accumulator scratch ------------------
def _fused12_fullk_kernel(adj_ref, x_ref, w1_ref, b1_ref, w2_ref, b2_ref, o_ref):
    # support1 for all nodes, recomputed per row stripe (x/W1/b1 are VMEM
    # resident, so this is MXU work hidden under the HBM-bound adj stream).
    s1 = (jnp.dot(x_ref[...], w1_ref[...], preferred_element_type=jnp.float32)
          + b1_ref[...]).astype(jnp.bfloat16)
    h = jnp.dot(adj_ref[...], s1, preferred_element_type=jnp.float32)
    _relu_linear_finalize(h, w2_ref, b2_ref, o_ref)


def _mid_fullk_kernel(adj_ref, s_ref, w_ref, b_ref, o_ref):
    h = jnp.dot(adj_ref[...], s_ref[...], preferred_element_type=jnp.float32)
    _relu_linear_finalize(h, w_ref, b_ref, o_ref)


def _ln_fullk_kernel(adj_ref, s_ref, gamma_ref, beta_ref, o_ref):
    h = jnp.dot(adj_ref[...], s_ref[...], preferred_element_type=jnp.float32)
    _layernorm_finalize(h, gamma_ref, beta_ref, o_ref)


# --- K-tiled fallback kernels: grid=(num_m, num_k), f32 acc scratch ---------
def _fused12_ktiled_kernel(adj_ref, x_ref, w1_ref, b1_ref, w2_ref, b2_ref,
                           o_ref, acc_ref):
    k = pl.program_id(1)
    s1 = (jnp.dot(x_ref[...], w1_ref[...], preferred_element_type=jnp.float32)
          + b1_ref[...]).astype(jnp.bfloat16)
    part = jnp.dot(adj_ref[...], s1, preferred_element_type=jnp.float32)

    @pl.when(k == 0)
    def _():
        acc_ref[...] = part          # no separate zero-init pass

    @pl.when(k > 0)
    def _():
        acc_ref[...] = acc_ref[...] + part

    @pl.when(k == pl.num_programs(1) - 1)
    def _():
        _relu_linear_finalize(acc_ref[...], w2_ref, b2_ref, o_ref)


def _mid_ktiled_kernel(adj_ref, s_ref, w_ref, b_ref, o_ref, acc_ref):
    k = pl.program_id(1)
    part = jnp.dot(adj_ref[...], s_ref[...], preferred_element_type=jnp.float32)

    @pl.when(k == 0)
    def _():
        acc_ref[...] = part

    @pl.when(k > 0)
    def _():
        acc_ref[...] = acc_ref[...] + part

    @pl.when(k == pl.num_programs(1) - 1)
    def _():
        _relu_linear_finalize(acc_ref[...], w_ref, b_ref, o_ref)


def _ln_ktiled_kernel(adj_ref, s_ref, gamma_ref, beta_ref, o_ref, acc_ref):
    k = pl.program_id(1)
    part = jnp.dot(adj_ref[...], s_ref[...], preferred_element_type=jnp.float32)

    @pl.when(k == 0)
    def _():
        acc_ref[...] = part

    @pl.when(k > 0)
    def _():
        acc_ref[...] = acc_ref[...] + part

    @pl.when(k == pl.num_programs(1) - 1)
    def _():
        _layernorm_finalize(acc_ref[...], gamma_ref, beta_ref, o_ref)


# ---------------------------------------------------------------------------
# Tiling / VMEM budgeting
# ---------------------------------------------------------------------------
def _choose_tiling(n, d, vmem_cap):
    """Pick row-stripe / K tiling from the per-chip VMEM capacity."""
    budget = int(vmem_cap * 0.45)                      # pipelined working set
    vmem_limit = min(int(vmem_cap * 0.75), 112 * 1024 * 1024)
    slack = 2 * 1024 * 1024                            # params + compiler scratch

    n128 = _round_up(max(n, 1), 128)
    pad_cap = int(n128 * 1.04)                         # allow <=~4% extra rows

    # Full-K working set: (tm, n_pad) bf16 adj stripe double-buffered,
    # resident (n_pad, d) support/x (2 bufs), fused s1 temp (f32+bf16),
    # output / f32 working tiles.
    def fullk_bytes(tm, n_pad):
        return 4 * tm * n_pad + 10 * n_pad * d + 12 * tm * d + slack

    if fullk_bytes(128, n128) <= budget:
        tm = 128
        while tm < min(n128, 2048):
            cand = tm + 128
            cand_pad = _round_up(n, cand)
            if cand_pad <= pad_cap and fullk_bytes(cand, cand_pad) <= budget:
                tm = cand
            else:
                break
        n_pad = _round_up(n, tm)
        # Keep >= 2 row stripes when possible so both v7x TensorCores get work.
        if n_pad == tm and n_pad >= 256:
            tm = _round_up(n_pad // 2, 128)
            n_pad = _round_up(n, tm)
        return dict(n_pad=n_pad, tm=tm, tk=n_pad,
                    num_m=n_pad // tm, num_k=1, vmem_limit=vmem_limit)

    # K-tiled fallback (very large graphs): big square tiles, tk >= 1024.
    def kt_bytes(t):
        return 4 * t * t + 22 * t * d + slack

    t = 1024
    while kt_bytes(t + 1024) <= budget:
        t += 1024
    while kt_bytes(t) > budget and t > 128:
        t -= 128
    t = max(t, 128)
    while t > 128 and _round_up(n, t) > pad_cap:
        t -= 128
    n_pad = _round_up(n, t)
    return dict(n_pad=n_pad, tm=t, tk=t,
                num_m=n_pad // t, num_k=n_pad // t, vmem_limit=vmem_limit)


# ---------------------------------------------------------------------------
# Stage runner
# ---------------------------------------------------------------------------
def _run_stage(fullk_kernel, ktiled_kernel, adj, k_operand, param_list,
               acc_dim, d_out, out_dtype, cfg, flops, bytes_accessed,
               transcendentals=0):
    tm, tk, n_pad = cfg["tm"], cfg["tk"], cfg["n_pad"]
    num_m, num_k = cfg["num_m"], cfg["num_k"]
    d_k = k_operand.shape[1]
    ce = pl.CostEstimate(flops=int(flops), transcendentals=int(transcendentals),
                         bytes_accessed=int(bytes_accessed))

    if num_k == 1:
        # Full-K: adj row-stripe streamed; support/x and params VMEM-resident.
        in_specs = ([pl.BlockSpec((tm, n_pad), lambda i: (i, 0)),
                     pl.BlockSpec((n_pad, d_k), lambda i: (0, 0))]
                    + [pl.BlockSpec(p.shape, lambda i: (0, 0)) for p in param_list])
        return pl.pallas_call(
            fullk_kernel,
            out_shape=jax.ShapeDtypeStruct((n_pad, d_out), out_dtype),
            grid=(num_m,),
            in_specs=in_specs,
            out_specs=pl.BlockSpec((tm, d_out), lambda i: (i, 0)),
            compiler_params=pltpu.CompilerParams(
                dimension_semantics=("parallel",),
                vmem_limit_bytes=cfg["vmem_limit"]),
            cost_estimate=ce,
        )(adj, k_operand, *param_list)

    # K-tiled fallback.
    in_specs = ([pl.BlockSpec((tm, tk), lambda i, k: (i, k)),
                 pl.BlockSpec((tk, d_k), lambda i, k: (k, 0))]
                + [pl.BlockSpec(p.shape, lambda i, k: (0, 0)) for p in param_list])
    return pl.pallas_call(
        ktiled_kernel,
        out_shape=jax.ShapeDtypeStruct((n_pad, d_out), out_dtype),
        grid=(num_m, num_k),
        in_specs=in_specs,
        out_specs=pl.BlockSpec((tm, d_out), lambda i, k: (i, 0)),
        scratch_shapes=[pltpu.VMEM((tm, acc_dim), jnp.float32)],
        compiler_params=pltpu.CompilerParams(
            dimension_semantics=("parallel", "arbitrary"),
            vmem_limit_bytes=cfg["vmem_limit"]),
        cost_estimate=ce,
    )(adj, k_operand, *param_list)


# ---------------------------------------------------------------------------
# Preparation (hoisted out of the per-forward hot path) + forward
# ---------------------------------------------------------------------------
def _prepare_params(params):
    return dict(
        w1=params["w1"].astype(jnp.bfloat16),
        w2=params["w2"].astype(jnp.bfloat16),
        w3=params["w3"].astype(jnp.bfloat16),
        b1=params["b1"].astype(jnp.float32).reshape(1, -1),
        b2=params["b2"].astype(jnp.float32).reshape(1, -1),
        b3=params["b3"].astype(jnp.float32).reshape(1, -1),
        gamma=params["gamma"].astype(jnp.float32).reshape(1, -1),
        beta=params["beta"].astype(jnp.float32).reshape(1, -1),
    )


def prepare_user_gnn_inputs(node_features, adj_matrix, n_pad):
    """bf16 cast + 128-aligned pad of the n^2 adjacency, done ONCE per graph."""
    n = node_features.shape[0]
    pad = n_pad - n
    x = node_features.astype(jnp.bfloat16)
    adj = adj_matrix.astype(jnp.bfloat16)
    if pad:
        x = jnp.pad(x, ((0, pad), (0, 0)))
        adj = jnp.pad(adj, ((0, pad), (0, pad)))
    return x, adj


def user_gnn_forward_prepared(x_pad, adj_pad, p, cfg):
    """Forward on pre-cast / pre-padded operands (the hot path)."""
    n_pad = cfg["n_pad"]
    din = x_pad.shape[1]
    dhid = p["w1"].shape[1]
    dout = p["w3"].shape[1]
    adj_bytes = 2 * n_pad * n_pad

    # Stage A: s2 = relu(adj @ (x @ W1 + b1)) @ W2 + b2
    s2 = _run_stage(
        _fused12_fullk_kernel, _fused12_ktiled_kernel,
        adj_pad, x_pad, [p["w1"], p["b1"], p["w2"], p["b2"]],
        acc_dim=dhid, d_out=dhid, out_dtype=jnp.bfloat16, cfg=cfg,
        flops=2 * n_pad * (n_pad * dhid + din * dhid + dhid * dhid),
        bytes_accessed=adj_bytes + 2 * n_pad * (din + dhid))

    # Stage B: s3 = relu(adj @ s2) @ W3 + b3
    s3 = _run_stage(
        _mid_fullk_kernel, _mid_ktiled_kernel,
        adj_pad, s2, [p["w3"], p["b3"]],
        acc_dim=dhid, d_out=dout, out_dtype=jnp.bfloat16, cfg=cfg,
        flops=2 * n_pad * (n_pad * dhid + dhid * dout),
        bytes_accessed=adj_bytes + 2 * n_pad * (dhid + dout))

    # Stage C: out = LayerNorm(adj @ s3)
    out = _run_stage(
        _ln_fullk_kernel, _ln_ktiled_kernel,
        adj_pad, s3, [p["gamma"], p["beta"]],
        acc_dim=dout, d_out=dout, out_dtype=jnp.float32, cfg=cfg,
        flops=2 * n_pad * n_pad * dout + 10 * n_pad * dout,
        bytes_accessed=adj_bytes + 2 * n_pad * dout + 4 * n_pad * dout,
        transcendentals=n_pad)
    return out


def user_gnn_forward(node_features, adj_matrix, params):
    """Convenience wrapper: tile selection + prepare + forward + un-pad."""
    n, din = node_features.shape
    p = _prepare_params(params)
    dhid = p["w1"].shape[1]
    dout = p["w3"].shape[1]
    d = max(din, dhid, dout)
    cfg = _choose_tiling(n, d, _vmem_capacity_bytes())
    x_pad, adj_pad = prepare_user_gnn_inputs(node_features, adj_matrix,
                                             cfg["n_pad"])
    out_pad = user_gnn_forward_prepared(x_pad, adj_pad, p, cfg)
    return out_pad[:n]


# ---------------------------------------------------------------------------
# Reference (pure JAX, f32) for a sanity check
# ---------------------------------------------------------------------------
def user_gnn_reference(x, adj, params):
    h = x
    for wk, bk, act in (("w1", "b1", True), ("w2", "b2", True), ("w3", "b3", False)):
        h = adj @ (h @ params[wk] + params[bk])
        if act:
            h = jnp.maximum(h, 0.0)
    mean = jnp.mean(h, axis=-1, keepdims=True)
    var = jnp.mean((h - mean) ** 2, axis=-1, keepdims=True)
    return (h - mean) * lax.rsqrt(var + 1e-5) * params["gamma"] + params["beta"]


# ---------------------------------------------------------------------------
# Synthetic setup
# ---------------------------------------------------------------------------
def init_params(key, input_dim=128, hidden_dim=128, output_dim=128):
    ks = jax.random.split(key, 6)
    scale = 0.05

    def lin(kw, kb, din, dout_):
        w = scale * jax.random.normal(kw, (din, dout_), dtype=jnp.float32)
        b = scale * jax.random.normal(kb, (1, dout_), dtype=jnp.float32)
        return w, b

    w1, b1 = lin(ks[0], ks[1], input_dim, hidden_dim)
    w2, b2 = lin(ks[2], ks[3], hidden_dim, hidden_dim)
    w3, b3 = lin(ks[4], ks[5], hidden_dim, output_dim)
    gamma = jnp.ones((1, output_dim), dtype=jnp.float32)
    beta = jnp.zeros((1, output_dim), dtype=jnp.float32)
    return dict(w1=w1, b1=b1, w2=w2, b2=b2, w3=w3, b3=b3,
                gamma=gamma, beta=beta)


def build_synthetic_adjacency(key, num_users):
    """Row-normalized adjacency with self loops (mimics build_adjacency_matrix)."""
    raw = jax.random.uniform(key, (num_users, num_users), dtype=jnp.float32)
    raw = (raw > 0.6).astype(jnp.float32) * 0.6
    raw = raw * (1.0 - jnp.eye(num_users, dtype=jnp.float32))
    raw = raw + jnp.eye(num_users, dtype=jnp.float32)
    degree = jnp.sum(raw, axis=1, keepdims=True)
    degree = jnp.where(degree == 0, 1.0, degree)
    return raw / degree


if __name__ == "__main__":
    num_users = 16
    input_dim = hidden_dim = output_dim = 128

    key = jax.random.PRNGKey(0)
    k_feat, k_adj, k_par = jax.random.split(key, 3)

    node_features = jax.random.normal(
        k_feat, (num_users, input_dim), dtype=jnp.float32)
    adj_matrix = build_synthetic_adjacency(k_adj, num_users)
    params = init_params(k_par, input_dim, hidden_dim, output_dim)

    out = user_gnn_forward(node_features, adj_matrix, params)
    out = jax.block_until_ready(out)

    # Reference with the same bf16-rounded matmul operands, f32 math.
    bf = lambda a: a.astype(jnp.bfloat16).astype(jnp.float32)
    ref_params = {k: (bf(v) if k in ("w1", "w2", "w3") else v)
                  for k, v in params.items()}
    ref = user_gnn_reference(bf(node_features), bf(adj_matrix), ref_params)

    assert out.shape == (num_users, output_dim)
    assert bool(jnp.all(jnp.isfinite(out)))
    assert bool(jnp.max(jnp.abs(out - ref)) < 0.1), float(jnp.max(jnp.abs(out - ref)))
    print("KERNEL_OK")
</pallas_src>

<mosaic_0001>
module attributes {stable_mosaic.version = 11 : i64} {
  func.func @_fused12_fullk_kernel(%arg0: i32, %arg1: memref<128x128xbf16, #tpu.memory_space<vmem>>, %arg2: memref<128x128xbf16, #tpu.memory_space<vmem>>, %arg3: memref<128x128xbf16, #tpu.memory_space<vmem>>, %arg4: memref<1x128xf32, #tpu.memory_space<vmem>>, %arg5: memref<128x128xbf16, #tpu.memory_space<vmem>>, %arg6: memref<1x128xf32, #tpu.memory_space<vmem>>, %arg7: memref<128x128xbf16, #tpu.memory_space<vmem>>) attributes {dimension_semantics = [#tpu.dimension_semantics<parallel>], iteration_bounds = array<i64: 1>, scalar_prefetch = 0 : i64, scratch_operands = 0 : i64, tpu.core_type = #tpu.core_type<tc>, window_params = [{transform_indices = @transform_0, window_bounds = array<i64: 128, 128>}, {pipeline_mode = #tpu.pipeline_mode<synchronous>, transform_indices = @transform_1, window_bounds = array<i64: 128, 128>}, {pipeline_mode = #tpu.pipeline_mode<synchronous>, transform_indices = @transform_2, window_bounds = array<i64: 128, 128>}, {pipeline_mode = #tpu.pipeline_mode<synchronous>, transform_indices = @transform_3, window_bounds = array<i64: 1, 128>}, {pipeline_mode = #tpu.pipeline_mode<synchronous>, transform_indices = @transform_4, window_bounds = array<i64: 128, 128>}, {pipeline_mode = #tpu.pipeline_mode<synchronous>, transform_indices = @transform_5, window_bounds = array<i64: 1, 128>}, {transform_indices = @transform_6, window_bounds = array<i64: 128, 128>}]} {
    %c0 = arith.constant 0 : index
    %c0_0 = arith.constant 0 : index
    %0 = vector.load %arg2[%c0, %c0_0] : memref<128x128xbf16, #tpu.memory_space<vmem>>, vector<128x128xbf16>
    %c0_1 = arith.constant 0 : index
    %c0_2 = arith.constant 0 : index
    %1 = vector.load %arg3[%c0_1, %c0_2] : memref<128x128xbf16, #tpu.memory_space<vmem>>, vector<128x128xbf16>
    %cst = arith.constant dense<0.000000e+00> : vector<128x128xf32>
    %2 = tpu.matmul %0, %1, %cst {dimension_numbers = #tpu.dot_dimension_numbers<[1], [0], [0], [1], [0, 0, 1, 1], [], []>} : vector<128x128xbf16>, vector<128x128xbf16>, vector<128x128xf32> -> vector<128x128xf32>
    %c0_3 = arith.constant 0 : index
    %c0_4 = arith.constant 0 : index
    %3 = vector.load %arg4[%c0_3, %c0_4] : memref<1x128xf32, #tpu.memory_space<vmem>>, vector<1x128xf32>
    %4 = vector.broadcast %3 : vector<1x128xf32> to vector<128x128xf32>
    %5 = arith.addf %2, %4 : vector<128x128xf32>
    %6 = arith.truncf %5 : vector<128x128xf32> to vector<128x128xbf16>
    %c0_5 = arith.constant 0 : index
    %c0_6 = arith.constant 0 : index
    %7 = vector.load %arg1[%c0_5, %c0_6] : memref<128x128xbf16, #tpu.memory_space<vmem>>, vector<128x128xbf16>
    %cst_7 = arith.constant dense<0.000000e+00> : vector<128x128xf32>
    %8 = tpu.matmul %7, %6, %cst_7 {dimension_numbers = #tpu.dot_dimension_numbers<[1], [0], [0], [1], [0, 0, 1, 1], [], []>} : vector<128x128xbf16>, vector<128x128xbf16>, vector<128x128xf32> -> vector<128x128xf32>
    %cst_8 = arith.constant 0.000000e+00 : f32
    %9 = vector.broadcast %cst_8 : f32 to vector<128x128xf32>
    %10 = arith.maximumf %8, %9 : vector<128x128xf32>
    %11 = arith.truncf %10 : vector<128x128xf32> to vector<128x128xbf16>
    %c0_9 = arith.constant 0 : index
    %c0_10 = arith.constant 0 : index
    %12 = vector.load %arg5[%c0_9, %c0_10] : memref<128x128xbf16, #tpu.memory_space<vmem>>, vector<128x128xbf16>
    %cst_11 = arith.constant dense<0.000000e+00> : vector<128x128xf32>
    %13 = tpu.matmul %11, %12, %cst_11 {dimension_numbers = #tpu.dot_dimension_numbers<[1], [0], [0], [1], [0, 0, 1, 1], [], []>} : vector<128x128xbf16>, vector<128x128xbf16>, vector<128x128xf32> -> vector<128x128xf32>
    %c0_12 = arith.constant 0 : index
    %c0_13 = arith.constant 0 : index
    %14 = vector.load %arg6[%c0_12, %c0_13] : memref<1x128xf32, #tpu.memory_space<vmem>>, vector<1x128xf32>
    %15 = vector.broadcast %14 : vector<1x128xf32> to vector<128x128xf32>
    %16 = arith.addf %13, %15 : vector<128x128xf32>
    %17 = arith.truncf %16 : vector<128x128xf32> to vector<128x128xbf16>
    %c0_14 = arith.constant 0 : index
    %c0_15 = arith.constant 0 : index
    %18 = vector.load %arg7[%c0_14, %c0_15] : memref<128x128xbf16, #tpu.memory_space<vmem>>, vector<128x128xbf16>
    tpu.vector_store %arg7[%c0_14, %c0_15], %17 {strides = array<i32>} : memref<128x128xbf16, #tpu.memory_space<vmem>>, vector<128x128xbf16>,
    return
  }
  func.func @transform_0(%arg0: i32) -> (i32, i32) {
    %c0_i32 = arith.constant 0 : i32
    %c0_i32_0 = arith.constant 0 : i32
    return %arg0, %c0_i32 : i32, i32
  }
  func.func @transform_1(%arg0: i32) -> (i32, i32) {
    %c0_i32 = arith.constant 0 : i32
    %c0_i32_0 = arith.constant 0 : i32
    %c0_i32_1 = arith.constant 0 : i32
    return %c0_i32, %c0_i32_0 : i32, i32
  }
  func.func @transform_2(%arg0: i32) -> (i32, i32) {
    %c0_i32 = arith.constant 0 : i32
    %c0_i32_0 = arith.constant 0 : i32
    %c0_i32_1 = arith.constant 0 : i32
    return %c0_i32, %c0_i32_0 : i32, i32
  }
  func.func @transform_3(%arg0: i32) -> (i32, i32) {
    %c0_i32 = arith.constant 0 : i32
    %c0_i32_0 = arith.constant 0 : i32
    %c0_i32_1 = arith.constant 0 : i32
    return %c0_i32, %c0_i32_0 : i32, i32
  }
  func.func @transform_4(%arg0: i32) -> (i32, i32) {
    %c0_i32 = arith.constant 0 : i32
    %c0_i32_0 = arith.constant 0 : i32
    %c0_i32_1 = arith.constant 0 : i32
    return %c0_i32, %c0_i32_0 : i32, i32
  }
  func.func @transform_5(%arg0: i32) -> (i32, i32) {
    %c0_i32 = arith.constant 0 : i32
    %c0_i32_0 = arith.constant 0 : i32
    %c0_i32_1 = arith.constant 0 : i32
    return %c0_i32, %c0_i32_0 : i32, i32
  }
  func.func @transform_6(%arg0: i32) -> (i32, i32) {
    %c0_i32 = arith.constant 0 : i32
    %c0_i32_0 = arith.constant 0 : i32
    return %arg0, %c0_i32 : i32, i32
  }
}

</mosaic_0001>

<llo_original>
// kernel: tpu_custom_call.1
$region0: #{tpu_custom_call.1}
  #allocation0 [shape = 'u32[]', space=smem, size = 0x4, offset = 0x4, fixed_abs, tag = 'smem constant byte address 0x4 - core index']
  #allocation1 [shape = 'u32[144,128]{1,0:T(1,128)}', space=vmem, size = 0x12000, scoped, tag = 'internal scratch']
  %s0 = inlined_call_operand.hbm [shape: bf16[128,128], index: 0, kind: input, shape index: {}]
  %s1 = inlined_call_operand.hbm [shape: bf16[128,128], index: 1, kind: input, shape index: {}]
  %s2 = inlined_call_operand.hbm [shape: bf16[128,128], index: 2, kind: input, shape index: {}]
  %s3 = inlined_call_operand.vmem [shape: f32[1,128], index: 3, kind: input, shape index: {}]
  %s4 = inlined_call_operand.hbm [shape: bf16[128,128], index: 4, kind: input, shape index: {}]
  %s5 = inlined_call_operand.vmem [shape: f32[1,128], index: 5, kind: input, shape index: {}]
  %s6 = inlined_call_operand.hbm [shape: bf16[128,128], index: 6, kind: output, shape index: {}]
  %s7 = sld [smem:[#allocation0]]
  $region50: #{tpu_custom_call.1} parent=0
    _
  %s9 = ssub.s32 1, %s7
  %s10 = scalar_select 0, %s9, %s7
  $region1: #{tpu_custom_call.1} parent=0
    #allocation2 [shape = 'u8[32768]{0}', space=vmem, size = 0x8000, scoped, tag = 'input window, operand 0, single buffered']
    #allocation3 [shape = 's32[1]{0}', space=sflag, size = 0x4, scoped, tag = 'scoped memory for tpu_custom_call.1']
    #allocation4 [shape = 's32[1]{0}', space=sflag, size = 0x4, scoped, tag = 'scoped memory for tpu_custom_call.1']
    #allocation5 [shape = 'u8[32768]{0}', space=vmem, size = 0x8000, scoped, tag = 'input window, operand 1, single buffered']
    #allocation6 [shape = 's32[1]{0}', space=sflag, size = 0x4, scoped, tag = 'scoped memory for tpu_custom_call.1']
    #allocation7 [shape = 'u8[32768]{0}', space=vmem, size = 0x8000, scoped, tag = 'input window, operand 2, single buffered']
    #allocation8 [shape = 'u8[32768]{0}', space=vmem, size = 0x8000, scoped, tag = 'input window, operand 4, single buffered']
    #allocation9 [shape = 's32[1]{0}', space=sflag, size = 0x4, scoped, tag = 'scoped memory for tpu_custom_call.1']
    #allocation10 [shape = 'u8[32768]{0}', space=vmem, size = 0x8000, scoped, tag = 'output window, operand 0, single buffered']
    %11 = vsyncpa [#allocation3], 0
    %12 = vsyncpa [#allocation6], 0
    %13 = vsyncpa [#allocation9], 0
    %14 = vsyncpa [#allocation4], 0
    // Predicated region
    $region2: #{tpu_custom_call.1} parent=1 // pred_check
      _
    $region3: #{tpu_custom_call.1} parent=1 // pred_check_branch
      %16 = sbr.rel (0) target = $region5
    $region4: #{tpu_custom_call.1} parent=1 // pred_region
      %s18 = ssub.s32 1024, 1024
      %19 = vsyncadd [#allocation3], %s18
      %s20 = sshll.u32 [#allocation2], 4
      %s21 = int_to_ptr.vmem [resolvable:$true] %s20
      %26 = dma.hbm_to_vmem [thread:$0]  %s0, 1024, %s21, [#allocation3], 64, 64, 4
    $region5: #{tpu_custom_call.1} parent=1 // pred_fallthru
      _
    // Predicated region
    $region6: #{tpu_custom_call.1} parent=1 // pred_check
      _
    $region7: #{tpu_custom_call.1} parent=1 // pred_check_branch
      %28 = sbr.rel (0) target = $region9
    $region8: #{tpu_custom_call.1} parent=1 // pred_region
      %s30 = ssub.s32 1024, 1024
      %31 = vsyncadd [#allocation6], %s30
      %s32 = sshll.u32 [#allocation5], 4
      %s33 = int_to_ptr.vmem [resolvable:$true] %s32
      %38 = dma.hbm_to_vmem [thread:$0]  %s1, 1024, %s33, [#allocation6], 64, 64, 4
    $region9: #{tpu_custom_call.1} parent=1 // pred_fallthru
      _
    // Predicated region
    $region10: #{tpu_custom_call.1} parent=1 // pred_check
      _
    $region11: #{tpu_custom_call.1} parent=1 // pred_check_branch
      %40 = sbr.rel (0) target = $region13
    $region12: #{tpu_custom_call.1} parent=1 // pred_region
      %s42 = ssub.s32 1024, 1024
      %43 = vsyncadd [#allocation6], %s42
      %s44 = sshll.u32 [#allocation7], 4
      %s45 = int_to_ptr.vmem [resolvable:$true] %s44
      %50 = dma.hbm_to_vmem [thread:$0]  %s2, 1024, %s45, [#allocation6], 64, 64, 4
    $region13: #{tpu_custom_call.1} parent=1 // pred_fallthru
      _
    // Predicated region
    $region14: #{tpu_custom_call.1} parent=1 // pred_check
      _
    $region15: #{tpu_custom_call.1} parent=1 // pred_check_branch
      %52 = sbr.rel (0) target = $region17
    $region16: #{tpu_custom_call.1} parent=1 // pred_region
      _
    $region17: #{tpu_custom_call.1} parent=1 // pred_fallthru
      _
    // Predicated region
    $region18: #{tpu_custom_call.1} parent=1 // pred_check
      _
    $region19: #{tpu_custom_call.1} parent=1 // pred_check_branch
      %54 = sbr.rel (0) target = $region21
    $region20: #{tpu_custom_call.1} parent=1 // pred_region
      %s56 = ssub.s32 1024, 1024
      %57 = vsyncadd [#allocation9], %s56
      %s58 = sshll.u32 [#allocation8], 4
      %s59 = int_to_ptr.vmem [resolvable:$true] %s58
      %64 = dma.hbm_to_vmem [thread:$0]  %s4, 1024, %s59, [#allocation9], 64, 64, 4
    $region21: #{tpu_custom_call.1} parent=1 // pred_fallthru
      _
    // Predicated region
    $region22: #{tpu_custom_call.1} parent=1 // pred_check
      _
    $region23: #{tpu_custom_call.1} parent=1 // pred_check_branch
      %66 = sbr.rel (0) target = $region25
    $region24: #{tpu_custom_call.1} parent=1 // pred_region
      _
    $region25: #{tpu_custom_call.1} parent=1 // pred_fallthru
      _
    // Predicated region
    $region26: #{tpu_custom_call.1} parent=1 // pred_check
      _
    $region27: #{tpu_custom_call.1} parent=1 // pred_check_branch
      %68 = sbr.rel (0) target = $region29
    $region28: #{tpu_custom_call.1} parent=1 // pred_region
      %69 = dma.done [#allocation3], 1024
    $region29: #{tpu_custom_call.1} parent=1 // pred_fallthru
      _
    // Predicated region
    $region30: #{tpu_custom_call.1} parent=1 // pred_check
      _
    $region31: #{tpu_custom_call.1} parent=1 // pred_check_branch
      %71 = sbr.rel (0) target = $region33
    $region32: #{tpu_custom_call.1} parent=1 // pred_region
      %72 = dma.done [#allocation6], 1024
    $region33: #{tpu_custom_call.1} parent=1 // pred_fallthru
      _
    // Predicated region
    $region34: #{tpu_custom_call.1} parent=1 // pred_check
      _
    $region35: #{tpu_custom_call.1} parent=1 // pred_check_branch
      %74 = sbr.rel (0) target = $region37
    $region36: #{tpu_custom_call.1} parent=1 // pred_region
      %75 = dma.done [#allocation6], 1024
    $region37: #{tpu_custom_call.1} parent=1 // pred_fallthru
      _
    // Predicated region
    $region38: #{tpu_custom_call.1} parent=1 // pred_check
      _
    $region39: #{tpu_custom_call.1} parent=1 // pred_check_branch
      %77 = sbr.rel (0) target = $region41
    $region40: #{tpu_custom_call.1} parent=1 // pred_region
      %78 = dma.done [#allocation9], 1024
    $region41: #{tpu_custom_call.1} parent=1 // pred_fallthru
      _
    %v80 = vld [vmem:[#allocation5] sm:$0xf]
    %v81 = vld [vmem:[#allocation5 + $0x4] sm:$0xf]
    %v82 = vld [vmem:[#allocation5 + $0x8] sm:$0xf]
    %v83 = vld [vmem:[#allocation5 + $0xc] sm:$0xf]
    %v84 = vld [vmem:[#allocation5 + $0x10] sm:$0xf]
    %v85 = vld [vmem:[#allocation5 + $0x14] sm:$0xf]
    %v86 = vld [vmem:[#allocation5 + $0x18] sm:$0xf]
    %v87 = vld [vmem:[#allocation5 + $0x1c] sm:$0xf]
    %v88 = vld [vmem:[#allocation5 + $0x20] sm:$0xf]
    %v89 = vld [vmem:[#allocation5 + $0x24] sm:$0xf]
    %v90 = vld [vmem:[#allocation5 + $0x28] sm:$0xf]
    %v91 = vld [vmem:[#allocation5 + $0x2c] sm:$0xf]
    %v92 = vld [vmem:[#allocation5 + $0x30] sm:$0xf]
    %v93 = vld [vmem:[#allocation5 + $0x34] sm:$0xf]
    %v94 = vld [vmem:[#allocation5 + $0x38] sm:$0xf]
    %v95 = vld [vmem:[#allocation5 + $0x3c] sm:$0xf]
    %v96 = vld [vmem:[#allocation7] sm:$0xf]
    %v97 = vld [vmem:[#allocation7 + $0x4] sm:$0xf]
    %v98 = vld [vmem:[#allocation7 + $0x8] sm:$0xf]
    %v99 = vld [vmem:[#allocation7 + $0xc] sm:$0xf]
    %v100 = vld [vmem:[#allocation7 + $0x10] sm:$0xf]
    %v101 = vld [vmem:[#allocation7 + $0x14] sm:$0xf]
    %v102 = vld [vmem:[#allocation7 + $0x18] sm:$0xf]
    %v103 = vld [vmem:[#allocation7 + $0x1c] sm:$0xf]
    %v104 = vld [vmem:[#allocation7 + $0x20] sm:$0xf]
    %v105 = vld [vmem:[#allocation7 + $0x24] sm:$0xf]
    %v106 = vld [vmem:[#allocation7 + $0x28] sm:$0xf]
    %v107 = vld [vmem:[#allocation7 + $0x2c] sm:$0xf]
    %v108 = vld [vmem:[#allocation7 + $0x30] sm:$0xf]
    %v109 = vld [vmem:[#allocation7 + $0x34] sm:$0xf]
    %v110 = vld [vmem:[#allocation7 + $0x38] sm:$0xf]
    %v111 = vld [vmem:[#allocation7 + $0x3c] sm:$0xf]
    %v112 = vld [vmem:[%s3] sm:$0x1]
    %v114 = vlaneseq
    %v115 = vshrl.u32 %v114, 7
    %v116 = vsub.s32 0, %v115
    %v117 = vrot.slane %v112, %v116
    %v135 = vunpack.c.l.b16 %v80
    %v136 = vunpack.c.l.b16 %v81
    %v137 = vunpack.c.l.b16 %v82
    %v138 = vunpack.c.l.b16 %v83
    %v139 = vunpack.c.l.b16 %v84
    %v140 = vunpack.c.l.b16 %v85
    %v141 = vunpack.c.l.b16 %v86
    %v142 = vunpack.c.l.b16 %v87
    %v143 = vunpack.c.l.b16 %v88
    %v144 = vunpack.c.l.b16 %v89
    %v145 = vunpack.c.l.b16 %v90
    %v146 = vunpack.c.l.b16 %v91
    %v147 = vunpack.c.l.b16 %v92
    %v148 = vunpack.c.l.b16 %v93
    %v149 = vunpack.c.l.b16 %v94
    %v150 = vunpack.c.l.b16 %v95
    %v151 = vpack.c.b16 %v136, %v135
    %v152 = vpack.c.b16 %v138, %v137
    %v153 = vpack.c.b16 %v140, %v139
    %v154 = vpack.c.b16 %v142, %v141
    %v155 = vpack.c.b16 %v144, %v143
    %v156 = vpack.c.b16 %v146, %v145
    %v157 = vpack.c.b16 %v148, %v147
    %v158 = vpack.c.b16 %v150, %v149
    %v183 = vunpack.c.l.b16 %v96
    %v184 = vunpack.c.l.b16 %v97
    %v185 = vunpack.c.l.b16 %v98
    %v186 = vunpack.c.l.b16 %v99
    %v187 = vunpack.c.l.b16 %v100
    %v188 = vunpack.c.l.b16 %v101
    %v189 = vunpack.c.l.b16 %v102
    %v190 = vunpack.c.l.b16 %v103
    %v191 = vunpack.c.l.b16 %v104
    %v192 = vunpack.c.l.b16 %v105
    %v193 = vunpack.c.l.b16 %v106
    %v194 = vunpack.c.l.b16 %v107
    %v195 = vunpack.c.l.b16 %v108
    %v196 = vunpack.c.l.b16 %v109
    %v197 = vunpack.c.l.b16 %v110
    %v198 = vunpack.c.l.b16 %v111
    %v199 = vpack.c.b16 %v184, %v183
    %v200 = vpack.c.b16 %v186, %v185
    %v201 = vpack.c.b16 %v188, %v187
    %v202 = vpack.c.b16 %v190, %v189
    %v203 = vpack.c.b16 %v192, %v191
    %v204 = vpack.c.b16 %v194, %v193
    %v205 = vpack.c.b16 %v196, %v195
    %v206 = vpack.c.b16 %v198, %v197
    %215 = vmatprep.subr.bf16.mxu0 0
    %216 = vmatpush1.bf16.msra.mxu0 %v206
    %217 = vmatprep.subr.bf16.mxu0 0
    %218 = vmatpush1.bf16.msra.mxu0 %v205
    %219 = vmatprep.subr.bf16.mxu0 0
    %220 = vmatpush1.bf16.msra.mxu0 %v204
    %221 = vmatprep.subr.bf16.mxu0 0
    %222 = vmatpush1.bf16.msra.mxu0 %v203
    %223 = vmatprep.subr.bf16.mxu0 0
    %224 = vmatpush1.bf16.msra.mxu0 %v202
    %225 = vmatprep.subr.bf16.mxu0 0
    %226 = vmatpush1.bf16.msra.mxu0 %v201
    %227 = vmatprep.subr.bf16.mxu0 0
    %228 = vmatpush1.bf16.msra.mxu0 %v200
    %229 = vmatprep.subr.bf16.mxu0 0
    %230 = vmatpush1.bf16.msra.mxu0 %v199
    %231 = vmatprep.subr.bf16.mxu0 0
    %232 = vmatpush2.bf16.msra.mxu0 0
    %233 = vmatprep.subr.bf16.mxu0 0
    %234 = vmatpush2.bf16.msra.mxu0 0
    %235 = vmatprep.subr.bf16.mxu0 0
    %236 = vmatpush2.bf16.msra.mxu0 0
    %237 = vmatprep.subr.bf16.mxu0 0
    %238 = vmatpush2.bf16.msra.mxu0 0
    %239 = vmatprep.subr.bf16.mxu0 0
    %240 = vmatpush2.bf16.msra.mxu0 0
    %241 = vmatprep.subr.bf16.mxu0 0
    %242 = vmatpush2.bf16.msra.mxu0 0
    %243 = vmatprep.subr.bf16.mxu0 0
    %244 = vmatpush2.bf16.msra.mxu0 0
    %245 = vmatprep.subr.bf16.mxu0 0
    %246 = vmatpush2.bf16.msra.mxu0 0
    %247 = vmatprep.mubr.bf16.mxu0 0
    %248 = vmatmul.mubr.bf16.gmra.mxu0 %v151
    %v249 = vpop.f32.mrf.mxu0
    %v250 = vadd.f32 %v117, %v249
    %v251 = vpop.f32.mrf.mxu0
    %v252 = vpop.f32.mrf.mxu0
    %v253 = vadd.f32 %v117, %v252
    %v254 = vpop.f32.mrf.mxu0
    %255 = vmatprep.mubr.bf16.mxu0 0
    %256 = vmatmul.mubr.bf16.gmra.mxu0 %v152
    %v257 = vpop.f32.mrf.mxu0
    %v258 = vadd.f32 %v117, %v257
    %v259 = vpop.f32.mrf.mxu0
    %v260 = vpop.f32.mrf.mxu0
    %v261 = vadd.f32 %v117, %v260
    %v262 = vpop.f32.mrf.mxu0
    %263 = vmatprep.mubr.bf16.mxu0 0
    %264 = vmatmul.mubr.bf16.gmra.mxu0 %v153
    %v265 = vpop.f32.mrf.mxu0
    %v266 = vadd.f32 %v117, %v265
    %v267 = vpop.f32.mrf.mxu0
    %v268 = vpop.f32.mrf.mxu0
    %v269 = vadd.f32 %v117, %v268
    %v270 = vpop.f32.mrf.mxu0
    %271 = vmatprep.mubr.bf16.mxu0 0
    %272 = vmatmul.mubr.bf16.gmra.mxu0 %v154
    %v273 = vpop.f32.mrf.mxu0
    %v274 = vadd.f32 %v117, %v273
    %v275 = vpop.f32.mrf.mxu0
    %v276 = vpop.f32.mrf.mxu0
    %v277 = vadd.f32 %v117, %v276
    %v278 = vpop.f32.mrf.mxu0
    %279 = vmatprep.mubr.bf16.mxu0 0
    %280 = vmatmul.mubr.bf16.gmra.mxu0 %v155
    %v281 = vpop.f32.mrf.mxu0
    %v282 = vadd.f32 %v117, %v281
    %v283 = vpop.f32.mrf.mxu0
    %v284 = vpop.f32.mrf.mxu0
    %v285 = vadd.f32 %v117, %v284
    %v286 = vpop.f32.mrf.mxu0
    %287 = vmatprep.mubr.bf16.mxu0 0
    %288 = vmatmul.mubr.bf16.gmra.mxu0 %v156
    %v289 = vpop.f32.mrf.mxu0
    %v290 = vadd.f32 %v117, %v289
    %v291 = vpop.f32.mrf.mxu0
    %v292 = vpop.f32.mrf.mxu0
    %v293 = vadd.f32 %v117, %v292
    %v294 = vpop.f32.mrf.mxu0
    %295 = vmatprep.mubr.bf16.mxu0 0
    %296 = vmatmul.mubr.bf16.gmra.mxu0 %v157
    %v297 = vpop.f32.mrf.mxu0
    %v298 = vadd.f32 %v117, %v297
    %v299 = vpop.f32.mrf.mxu0
    %v300 = vpop.f32.mrf.mxu0
    %v301 = vadd.f32 %v117, %v300
    %v302 = vpop.f32.mrf.mxu0
    %303 = vmatprep.mubr.bf16.mxu0 0
    %304 = vmatmul.mubr.bf16.gmra.mxu0 %v158
    %v305 = vpop.f32.mrf.mxu0
    %v306 = vadd.f32 %v117, %v305
    %v307 = vpop.f32.mrf.mxu0
    %v308 = vpop.f32.mrf.mxu0
    %v309 = vadd.f32 %v117, %v308
    %v310 = vpop.f32.mrf.mxu0
    %311 = vdwg.mxu0
    %v312 = vpack.c.bf16 %v253, %v250
    %v313 = vpack.c.bf16 %v261, %v258
    %v314 = vpack.c.bf16 %v269, %v266
    %v315 = vpack.c.bf16 %v277, %v274
    %v316 = vpack.c.bf16 %v285, %v282
    %v317 = vpack.c.bf16 %v293, %v290
    %v318 = vpack.c.bf16 %v301, %v298
    %v319 = vpack.c.bf16 %v309, %v306
    %v320 = vld [vmem:[#allocation2] sm:$0xf]
    %v321 = vld [vmem:[#allocation2 + $0x4] sm:$0xf]
    %v322 = vld [vmem:[#allocation2 + $0x8] sm:$0xf]
    %v323 = vld [vmem:[#allocation2 + $0xc] sm:$0xf]
    %v324 = vld [vmem:[#allocation2 + $0x10] sm:$0xf]
    %v325 = vld [vmem:[#allocation2 + $0x14] sm:$0xf]
    %v326 = vld [vmem:[#allocation2 + $0x18] sm:$0xf]
    %v327 = vld [vmem:[#allocation2 + $0x1c] sm:$0xf]
    %v328 = vld [vmem:[#allocation2 + $0x20] sm:$0xf]
    %v329 = vld [vmem:[#allocation2 + $0x24] sm:$0xf]
    %v330 = vld [vmem:[#allocation2 + $0x28] sm:$0xf]
    %v331 = vld [vmem:[#allocation2 + $0x2c] sm:$0xf]
    %v332 = vld [vmem:[#allocation2 + $0x30] sm:$0xf]
    %v333 = vld [vmem:[#allocation2 + $0x34] sm:$0xf]
    %v334 = vld [vmem:[#allocation2 + $0x38] sm:$0xf]
    %v335 = vld [vmem:[#allocation2 + $0x3c] sm:$0xf]
    %v352 = vunpack.c.l.b16 %v320
    %v353 = vunpack.c.l.b16 %v321
    %v354 = vunpack.c.l.b16 %v322
    %v355 = vunpack.c.l.b16 %v323
    %v356 = vunpack.c.l.b16 %v324
    %v357 = vunpack.c.l.b16 %v325
    %v358 = vunpack.c.l.b16 %v326
    %v359 = vunpack.c.l.b16 %v327
    %v360 = vunpack.c.l.b16 %v328
    %v361 = vunpack.c.l.b16 %v329
    %v362 = vunpack.c.l.b16 %v330
    %v363 = vunpack.c.l.b16 %v331
    %v364 = vunpack.c.l.b16 %v332
    %v365 = vunpack.c.l.b16 %v333
    %v366 = vunpack.c.l.b16 %v334
    %v367 = vunpack.c.l.b16 %v335
    %v368 = vpack.c.b16 %v353, %v352
    %v369 = vpack.c.b16 %v355, %v354
    %v370 = vpack.c.b16 %v357, %v356
    %v371 = vpack.c.b16 %v359, %v358
    %v372 = vpack.c.b16 %v361, %v360
    %v373 = vpack.c.b16 %v363, %v362
    %v374 = vpack.c.b16 %v365, %v364
    %v375 = vpack.c.b16 %v367, %v366
    %384 = vmatprep.subr.bf16.mxu0 0
    %385 = vmatpush1.bf16.msra.mxu0 %v319
    %386 = vmatprep.subr.bf16.mxu0 0
    %387 = vmatpush1.bf16.msra.mxu0 %v318
    %388 = vmatprep.subr.bf16.mxu0 0
    %389 = vmatpush1.bf16.msra.mxu0 %v317
    %390 = vmatprep.subr.bf16.mxu0 0
    %391 = vmatpush1.bf16.msra.mxu0 %v316
    %392 = vmatprep.subr.bf16.mxu0 0
    %393 = vmatpush1.bf16.msra.mxu0 %v315
    %394 = vmatprep.subr.bf16.mxu0 0
    %395 = vmatpush1.bf16.msra.mxu0 %v314
    %396 = vmatprep.subr.bf16.mxu0 0
    %397 = vmatpush1.bf16.msra.mxu0 %v313
    %398 = vmatprep.subr.bf16.mxu0 0
    %399 = vmatpush1.bf16.msra.mxu0 %v312
    %400 = vmatprep.subr.bf16.mxu0 0
    %401 = vmatpush2.bf16.msra.mxu0 0
    %402 = vmatprep.subr.bf16.mxu0 0
    %403 = vmatpush2.bf16.msra.mxu0 0
    %404 = vmatprep.subr.bf16.mxu0 0
    %405 = vmatpush2.bf16.msra.mxu0 0
    %406 = vmatprep.subr.bf16.mxu0 0
    %407 = vmatpush2.bf16.msra.mxu0 0
    %408 = vmatprep.subr.bf16.mxu0 0
    %409 = vmatpush2.bf16.msra.mxu0 0
    %410 = vmatprep.subr.bf16.mxu0 0
    %411 = vmatpush2.bf16.msra.mxu0 0
    %412 = vmatprep.subr.bf16.mxu0 0
    %413 = vmatpush2.bf16.msra.mxu0 0
    %414 = vmatprep.subr.bf16.mxu0 0
    %415 = vmatpush2.bf16.msra.mxu0 0
    %416 = vmatprep.mubr.bf16.mxu0 0
    %417 = vmatmul.mubr.bf16.gmra.mxu0 %v368
    %v418 = vpop.f32.mrf.mxu0
    %v419 = vadd.f32 0.0, %v418
    %v420 = vpop.f32.mrf.mxu0
    %v421 = vpop.f32.mrf.mxu0
    %v422 = vadd.f32 0.0, %v421
    %v423 = vpop.f32.mrf.mxu0
    %424 = vmatprep.mubr.bf16.mxu0 0
    %425 = vmatmul.mubr.bf16.gmra.mxu0 %v369
    %v426 = vpop.f32.mrf.mxu0
    %v427 = vadd.f32 0.0, %v426
    %v428 = vpop.f32.mrf.mxu0
    %v429 = vpop.f32.mrf.mxu0
    %v430 = vadd.f32 0.0, %v429
    %v431 = vpop.f32.mrf.mxu0
    %432 = vmatprep.mubr.bf16.mxu0 0
    %433 = vmatmul.mubr.bf16.gmra.mxu0 %v370
    %v434 = vpop.f32.mrf.mxu0
    %v435 = vadd.f32 0.0, %v434
    %v436 = vpop.f32.mrf.mxu0
    %v437 = vpop.f32.mrf.mxu0
    %v438 = vadd.f32 0.0, %v437
    %v439 = vpop.f32.mrf.mxu0
    %440 = vmatprep.mubr.bf16.mxu0 0
    %441 = vmatmul.mubr.bf16.gmra.mxu0 %v371
    %v442 = vpop.f32.mrf.mxu0
    %v443 = vadd.f32 0.0, %v442
    %v444 = vpop.f32.mrf.mxu0
    %v445 = vpop.f32.mrf.mxu0
    %v446 = vadd.f32 0.0, %v445
    %v447 = vpop.f32.mrf.mxu0
    %448 = vmatprep.mubr.bf16.mxu0 0
    %449 = vmatmul.mubr.bf16.gmra.mxu0 %v372
    %v450 = vpop.f32.mrf.mxu0
    %v451 = vadd.f32 0.0, %v450
    %v452 = vpop.f32.mrf.mxu0
    %v453 = vpop.f32.mrf.mxu0
    %v454 = vadd.f32 0.0, %v453
    %v455 = vpop.f32.mrf.mxu0
    %456 = vmatprep.mubr.bf16.mxu0 0
    %457 = vmatmul.mubr.bf16.gmra.mxu0 %v373
    %v458 = vpop.f32.mrf.mxu0
    %v459 = vadd.f32 0.0, %v458
    %v460 = vpop.f32.mrf.mxu0
    %v461 = vpop.f32.mrf.mxu0
    %v462 = vadd.f32 0.0, %v461
    %v463 = vpop.f32.mrf.mxu0
    %464 = vmatprep.mubr.bf16.mxu0 0
    %465 = vmatmul.mubr.bf16.gmra.mxu0 %v374
    %v466 = vpop.f32.mrf.mxu0
    %v467 = vadd.f32 0.0, %v466
    %v468 = vpop.f32.mrf.mxu0
    %v469 = vpop.f32.mrf.mxu0
    %v470 = vadd.f32 0.0, %v469
    %v471 = vpop.f32.mrf.mxu0
    %472 = vmatprep.mubr.bf16.mxu0 0
    %473 = vmatmul.mubr.bf16.gmra.mxu0 %v375
    %v474 = vpop.f32.mrf.mxu0
    %v475 = vadd.f32 0.0, %v474
    %v476 = vpop.f32.mrf.mxu0
    %v477 = vpop.f32.mrf.mxu0
    %v478 = vadd.f32 0.0, %v477
    %v479 = vpop.f32.mrf.mxu0
    %480 = vdwg.mxu0
    %v481 = vmax.f32 %v419, 0.0
    %v482 = vmax.f32 %v422, 0.0
    %v483 = vmax.f32 %v427, 0.0
    %v484 = vmax.f32 %v430, 0.0
    %v485 = vmax.f32 %v435, 0.0
    %v486 = vmax.f32 %v438, 0.0
    %v487 = vmax.f32 %v443, 0.0
    %v488 = vmax.f32 %v446, 0.0
    %v489 = vmax.f32 %v451, 0.0
    %v490 = vmax.f32 %v454, 0.0
    %v491 = vmax.f32 %v459, 0.0
    %v492 = vmax.f32 %v462, 0.0
    %v493 = vmax.f32 %v467, 0.0
    %v494 = vmax.f32 %v470, 0.0
    %v495 = vmax.f32 %v475, 0.0
    %v496 = vmax.f32 %v478, 0.0
    %v497 = vpack.c.bf16 %v482, %v481
    %v498 = vpack.c.bf16 %v484, %v483
    %v499 = vpack.c.bf16 %v486, %v485
    %v500 = vpack.c.bf16 %v488, %v487
    %v501 = vpack.c.bf16 %v490, %v489
    %v502 = vpack.c.bf16 %v492, %v491
    %v503 = vpack.c.bf16 %v494, %v493
    %v504 = vpack.c.bf16 %v496, %v495
    %v505 = vld [vmem:[#allocation8] sm:$0xf]
    %v506 = vld [vmem:[#allocation8 + $0x4] sm:$0xf]
    %v507 = vld [vmem:[#allocation8 + $0x8] sm:$0xf]
    %v508 = vld [vmem:[#allocation8 + $0xc] sm:$0xf]
    %v509 = vld [vmem:[#allocation8 + $0x10] sm:$0xf]
    %v510 = vld [vmem:[#allocation8 + $0x14] sm:$0xf]
    %v511 = vld [vmem:[#allocation8 + $0x18] sm:$0xf]
    %v512 = vld [vmem:[#allocation8 + $0x1c] sm:$0xf]
    %v513 = vld [vmem:[#allocation8 + $0x20] sm:$0xf]
    %v514 = vld [vmem:[#allocation8 + $0x24] sm:$0xf]
    %v515 = vld [vmem:[#allocation8 + $0x28] sm:$0xf]
    %v516 = vld [vmem:[#allocation8 + $0x2c] sm:$0xf]
    %v517 = vld [vmem:[#allocation8 + $0x30] sm:$0xf]
    %v518 = vld [vmem:[#allocation8 + $0x34] sm:$0xf]
    %v519 = vld [vmem:[#allocation8 + $0x38] sm:$0xf]
    %v520 = vld [vmem:[#allocation8 + $0x3c] sm:$0xf]
    %v521 = vld [vmem:[%s5] sm:$0x1]
    %v523 = vlaneseq
    %v524 = vshrl.u32 %v523, 7
    %v525 = vsub.s32 0, %v524
    %v526 = vrot.slane %v521, %v525
    %v544 = vunpack.c.l.b16 %v505
    %v545 = vunpack.c.l.b16 %v506
    %v546 = vunpack.c.l.b16 %v507
    %v547 = vunpack.c.l.b16 %v508
    %v548 = vunpack.c.l.b16 %v509
    %v549 = vunpack.c.l.b16 %v510
    %v550 = vunpack.c.l.b16 %v511
    %v551 = vunpack.c.l.b16 %v512
    %v552 = vunpack.c.l.b16 %v513
    %v553 = vunpack.c.l.b16 %v514
    %v554 = vunpack.c.l.b16 %v515
    %v555 = vunpack.c.l.b16 %v516
    %v556 = vunpack.c.l.b16 %v517
    %v557 = vunpack.c.l.b16 %v518
    %v558 = vunpack.c.l.b16 %v519
    %v559 = vunpack.c.l.b16 %v520
    %v560 = vpack.c.b16 %v545, %v544
    %v561 = vpack.c.b16 %v547, %v546
    %v562 = vpack.c.b16 %v549, %v548
    %v563 = vpack.c.b16 %v551, %v550
    %v564 = vpack.c.b16 %v553, %v552
    %v565 = vpack.c.b16 %v555, %v554
    %v566 = vpack.c.b16 %v557, %v556
    %v567 = vpack.c.b16 %v559, %v558
    %576 = vmatprep.subr.bf16.mxu0 0
    %577 = vmatpush1.bf16.msra.mxu0 %v567
    %578 = vmatprep.subr.bf16.mxu0 0
    %579 = vmatpush1.bf16.msra.mxu0 %v566
    %580 = vmatprep.subr.bf16.mxu0 0
    %581 = vmatpush1.bf16.msra.mxu0 %v565
    %582 = vmatprep.subr.bf16.mxu0 0
    %583 = vmatpush1.bf16.msra.mxu0 %v564
    %584 = vmatprep.subr.bf16.mxu0 0
    %585 = vmatpush1.bf16.msra.mxu0 %v563
    %586 = vmatprep.subr.bf16.mxu0 0
    %587 = vmatpush1.bf16.msra.mxu0 %v562
    %588 = vmatprep.subr.bf16.mxu0 0
    %589 = vmatpush1.bf16.msra.mxu0 %v561
    %590 = vmatprep.subr.bf16.mxu0 0
    %591 = vmatpush1.bf16.msra.mxu0 %v560
    %592 = vmatprep.subr.bf16.mxu0 0
    %593 = vmatpush2.bf16.msra.mxu0 0
    %594 = vmatprep.subr.bf16.mxu0 0
    %595 = vmatpush2.bf16.msra.mxu0 0
    %596 = vmatprep.subr.bf16.mxu0 0
    %597 = vmatpush2.bf16.msra.mxu0 0
    %598 = vmatprep.subr.bf16.mxu0 0
    %599 = vmatpush2.bf16.msra.mxu0 0
    %600 = vmatprep.subr.bf16.mxu0 0
    %601 = vmatpush2.bf16.msra.mxu0 0
    %602 = vmatprep.subr.bf16.mxu0 0
    %603 = vmatpush2.bf16.msra.mxu0 0
    %604 = vmatprep.subr.bf16.mxu0 0
    %605 = vmatpush2.bf16.msra.mxu0 0
    %606 = vmatprep.subr.bf16.mxu0 0
    %607 = vmatpush2.bf16.msra.mxu0 0
    %608 = vmatprep.mubr.bf16.mxu0 0
    %609 = vmatmul.mubr.bf16.gmra.mxu0 %v497
    %v610 = vpop.f32.mrf.mxu0
    %v611 = vadd.f32 %v526, %v610
    %v612 = vpop.f32.mrf.mxu0
    %v613 = vpop.f32.mrf.mxu0
    %v614 = vadd.f32 %v526, %v613
    %v615 = vpop.f32.mrf.mxu0
    %616 = vmatprep.mubr.bf16.mxu0 0
    %617 = vmatmul.mubr.bf16.gmra.mxu0 %v498
    %v618 = vpop.f32.mrf.mxu0
    %v619 = vadd.f32 %v526, %v618
    %v620 = vpop.f32.mrf.mxu0
    %v621 = vpop.f32.mrf.mxu0
    %v622 = vadd.f32 %v526, %v621
    %v623 = vpop.f32.mrf.mxu0
    %624 = vmatprep.mubr.bf16.mxu0 0
    %625 = vmatmul.mubr.bf16.gmra.mxu0 %v499
    %v626 = vpop.f32.mrf.mxu0
    %v627 = vadd.f32 %v526, %v626
    %v628 = vpop.f32.mrf.mxu0
    %v629 = vpop.f32.mrf.mxu0
    %v630 = vadd.f32 %v526, %v629
    %v631 = vpop.f32.mrf.mxu0
    %632 = vmatprep.mubr.bf16.mxu0 0
    %633 = vmatmul.mubr.bf16.gmra.mxu0 %v500
    %v634 = vpop.f32.mrf.mxu0
    %v635 = vadd.f32 %v526, %v634
    %v636 = vpop.f32.mrf.mxu0
    %v637 = vpop.f32.mrf.mxu0
    %v638 = vadd.f32 %v526, %v637
    %v639 = vpop.f32.mrf.mxu0
    %640 = vmatprep.mubr.bf16.mxu0 0
    %641 = vmatmul.mubr.bf16.gmra.mxu0 %v501
    %v642 = vpop.f32.mrf.mxu0
    %v643 = vadd.f32 %v526, %v642
    %v644 = vpop.f32.mrf.mxu0
    %v645 = vpop.f32.mrf.mxu0
    %v646 = vadd.f32 %v526, %v645
    %v647 = vpop.f32.mrf.mxu0
    %648 = vmatprep.mubr.bf16.mxu0 0
    %649 = vmatmul.mubr.bf16.gmra.mxu0 %v502
    %v650 = vpop.f32.mrf.mxu0
    %v651 = vadd.f32 %v526, %v650
    %v652 = vpop.f32.mrf.mxu0
    %v653 = vpop.f32.mrf.mxu0
    %v654 = vadd.f32 %v526, %v653
    %v655 = vpop.f32.mrf.mxu0
    %656 = vmatprep.mubr.bf16.mxu0 0
    %657 = vmatmul.mubr.bf16.gmra.mxu0 %v503
    %v658 = vpop.f32.mrf.mxu0
    %v659 = vadd.f32 %v526, %v658
    %v660 = vpop.f32.mrf.mxu0
    %v661 = vpop.f32.mrf.mxu0
    %v662 = vadd.f32 %v526, %v661
    %v663 = vpop.f32.mrf.mxu0
    %664 = vmatprep.mubr.bf16.mxu0 0
    %665 = vmatmul.mubr.bf16.gmra.mxu0 %v504
    %v666 = vpop.f32.mrf.mxu0
    %v667 = vadd.f32 %v526, %v666
    %v668 = vpop.f32.mrf.mxu0
    %v669 = vpop.f32.mrf.mxu0
    %v670 = vadd.f32 %v526, %v669
    %v671 = vpop.f32.mrf.mxu0
    %672 = vdwg.mxu0
    %v673 = vpack.c.bf16 %v614, %v611
    %v674 = vpack.c.bf16 %v622, %v619
    %v675 = vpack.c.bf16 %v630, %v627
    %v676 = vpack.c.bf16 %v638, %v635
    %v677 = vpack.c.bf16 %v646, %v643
    %v678 = vpack.c.bf16 %v654, %v651
    %v679 = vpack.c.bf16 %v662, %v659
    %v680 = vpack.c.bf16 %v670, %v667
    %v689 = vunpack.c.l.b16 %v673
    %v690 = vunpack.c.h.b16 %v673
    %v691 = vunpack.c.l.b16 %v674
    %v692 = vunpack.c.h.b16 %v674
    %v693 = vunpack.c.l.b16 %v675
    %v694 = vunpack.c.h.b16 %v675
    %v695 = vunpack.c.l.b16 %v676
    %v696 = vunpack.c.h.b16 %v676
    %v697 = vunpack.c.l.b16 %v677
    %v698 = vunpack.c.h.b16 %v677
    %v699 = vunpack.c.l.b16 %v678
    %v700 = vunpack.c.h.b16 %v678
    %v701 = vunpack.c.l.b16 %v679
    %v702 = vunpack.c.h.b16 %v679
    %v703 = vunpack.c.l.b16 %v680
    %v704 = vunpack.c.h.b16 %v680
    %v705 = vpack.c.b16 %v689, %v689
    %v706 = vpack.c.b16 %v690, %v690
    %v707 = vpack.c.b16 %v691, %v691
    %v708 = vpack.c.b16 %v692, %v692
    %v709 = vpack.c.b16 %v693, %v693
    %v710 = vpack.c.b16 %v694, %v694
    %v711 = vpack.c.b16 %v695, %v695
    %v712 = vpack.c.b16 %v696, %v696
    %v713 = vpack.c.b16 %v697, %v697
    %v714 = vpack.c.b16 %v698, %v698
    %v715 = vpack.c.b16 %v699, %v699
    %v716 = vpack.c.b16 %v700, %v700
    %v717 = vpack.c.b16 %v701, %v701
    %v718 = vpack.c.b16 %v702, %v702
    %v719 = vpack.c.b16 %v703, %v703
    %v720 = vpack.c.b16 %v704, %v704
    %737 = vst [vmem:[#allocation10] sm:$0xf] %v705
    %738 = vst [vmem:[#allocation10 + $0x4] sm:$0xf] %v706
    %739 = vst [vmem:[#allocation10 + $0x8] sm:$0xf] %v707
    %740 = vst [vmem:[#allocation10 + $0xc] sm:$0xf] %v708
    %741 = vst [vmem:[#allocation10 + $0x10] sm:$0xf] %v709
    %742 = vst [vmem:[#allocation10 + $0x14] sm:$0xf] %v710
    %743 = vst [vmem:[#allocation10 + $0x18] sm:$0xf] %v711
    %744 = vst [vmem:[#allocation10 + $0x1c] sm:$0xf] %v712
    %745 = vst [vmem:[#allocation10 + $0x20] sm:$0xf] %v713
    %746 = vst [vmem:[#allocation10 + $0x24] sm:$0xf] %v714
    %747 = vst [vmem:[#allocation10 + $0x28] sm:$0xf] %v715
    %748 = vst [vmem:[#allocation10 + $0x2c] sm:$0xf] %v716
    %749 = vst [vmem:[#allocation10 + $0x30] sm:$0xf] %v717
    %750 = vst [vmem:[#allocation10 + $0x34] sm:$0xf] %v718
    %751 = vst [vmem:[#allocation10 + $0x38] sm:$0xf] %v719
    %752 = vst [vmem:[#allocation10 + $0x3c] sm:$0xf] %v720
    // Predicated region
    $region42: #{tpu_custom_call.1} parent=1 // pred_check
      _
    $region43: #{tpu_custom_call.1} parent=1 // pred_check_branch
      %754 = sbr.rel (0) target = $region45
    $region44: #{tpu_custom_call.1} parent=1 // pred_region
      %s756 = ssub.s32 1024, 1024
      %757 = vsyncadd [#allocation4], %s756
      %s758 = sshll.u32 [#allocation10], 4
      %s759 = int_to_ptr.vmem [resolvable:$true] %s758
      %764 = dma.vmem_to_hbm [thread:$0]  %s759, 1024, %s6, [#allocation4], 64, 64, 4
    $region45: #{tpu_custom_call.1} parent=1 // pred_fallthru
      _
    // Predicated region
    $region46: #{tpu_custom_call.1} parent=1 // pred_check
      _
    $region47: #{tpu_custom_call.1} parent=1 // pred_check_branch
      %766 = sbr.rel (0) target = $region49
    $region48: #{tpu_custom_call.1} parent=1 // pred_region
      %767 = dma.done [#allocation4], 1024
    $region49: #{tpu_custom_call.1} parent=1 // pred_fallthru
      _
    %768 = vsyncpa [#allocation3], 1
    %769 = vsyncpa [#allocation6], 1
    %770 = vsyncpa [#allocation9], 1
    %771 = vsyncpa [#allocation4], 1

</llo_original>
